<compile_context>
chip_gen: v6e
topology: v6e:2x2x1
jax: 0.10.0
libtpu: 0.0.40
codegen_flags: <defaults>
</compile_context>

<pallas_src>
import numpy as np
import jax
import jax.numpy as jnp
from jax.experimental import pallas as pl
from jax.experimental.pallas import tpu as pltpu

LATENT_DIM = 512
N_STYLE_LAYERS = 8          # small synthetic W+ depth (real FFHQ e4e uses 18)
MIX_LAYER_RANGE = (2, 6)    # args.mix_layer_range
E4E_SIZE = 8                # args.e4e_size
COLOR_ENCODER_SIZE = 8      # args.encoder_size


# ----------------------------------------------------------------------------
# Host-side glue: bilinear interpolation matrices matching
# F.interpolate(mode='bilinear', align_corners=False).
# resize(x) == A_h @ x @ A_w^T per (batch, channel);
# row-major flatten: vec(resize(x)) == kron(A_h, A_w) @ vec(x).
# ----------------------------------------------------------------------------
def bilinear_matrix(in_size: int, out_size: int) -> np.ndarray:
    scale = in_size / out_size
    out_idx = np.arange(out_size, dtype=np.float64)
    src = (out_idx + 0.5) * scale - 0.5
    src = np.clip(src, 0.0, in_size - 1)
    lo = np.floor(src).astype(np.int64)
    hi = np.minimum(lo + 1, in_size - 1)
    w_hi = (src - lo).astype(np.float32)
    w_lo = (1.0 - w_hi).astype(np.float32)
    A = np.zeros((out_size, in_size), dtype=np.float32)
    A[np.arange(out_size), lo] += w_lo
    A[np.arange(out_size), hi] += w_hi
    return A


# ----------------------------------------------------------------------------
# The single fused kernel: one MXU pass per N-tile + f32 bias add, lane-dense output.
# ----------------------------------------------------------------------------
def _fused_forward_kernel(x_ref, w_ref, b_ref, o_ref):
    x = x_ref[...].astype(jnp.bfloat16)          # bf16 operands, f32 accumulation
    acc = jnp.dot(x, w_ref[...], preferred_element_type=jnp.float32)
    o_ref[...] = acc + b_ref[...]                # epilogue stays f32 (v5e-friendly)


def _pick_n_tile(N: int) -> int:
    for t in (1024, 512, 256, 128):
        if N % t == 0:
            return t
    return N


def fused_forward(x_flat: jnp.ndarray, w_final: jnp.ndarray, b_final: jnp.ndarray):
    """x_flat: (B, K) f32 ; w_final: (K, N) bf16 ; b_final: (1, N) f32 -> (B, N) f32."""
    B, K = x_flat.shape
    N = w_final.shape[1]
    n_tile = _pick_n_tile(N)
    grid = (N // n_tile,)

    cost = pl.CostEstimate(
        flops=2 * B * K * N,
        transcendentals=0,
        bytes_accessed=(B * K * 4) + (K * N * 2) + (N * 4) + (B * N * 4),
    )
    return pl.pallas_call(
        _fused_forward_kernel,
        out_shape=jax.ShapeDtypeStruct((B, N), jnp.float32),
        grid=grid,
        in_specs=[
            pl.BlockSpec((B, K), lambda j: (0, 0)),        # activations resident
            pl.BlockSpec((K, n_tile), lambda j: (0, j)),   # weight streamed per tile
            pl.BlockSpec((1, n_tile), lambda j: (0, j)),
        ],
        out_specs=pl.BlockSpec((B, n_tile), lambda j: (0, j)),
        compiler_params=pltpu.CompilerParams(
            # independent N tiles: shards across both TCs on v7x, harmless on 1-TC chips
            dimension_semantics=("parallel",),
            # explicit, headroom-safe on every generation (v7x scoped default is 32 MiB)
            vmem_limit_bytes=16 << 20,
        ),
        cost_estimate=cost,
    )(x_flat, w_final, b_final)


# ----------------------------------------------------------------------------
# Jitted end-to-end forward: flatten -> pad batch to sublane quantum -> one
# pallas_call -> slice/reshape.  Keyed on input shapes by jit.
# ----------------------------------------------------------------------------
@jax.jit
def _jitted_forward(imgs_nchw, w_final, b_final):
    B = imgs_nchw.shape[0]
    x_flat = imgs_nchw.reshape(B, -1)
    B_pad = max(8, ((B + 7) // 8) * 8)              # pad batch to sublane quantum
    x_pad = jnp.pad(x_flat, ((0, B_pad - B), (0, 0)))
    y = fused_forward(x_pad, w_final, b_final)      # (B_pad, L*512)
    n_layers = b_final.shape[1] // LATENT_DIM
    return y[:B].reshape(B, n_layers, LATENT_DIM)


# ----------------------------------------------------------------------------
# Initializer (args.init_latent is None branch)
# ----------------------------------------------------------------------------
class Initializer:
    def __init__(self, key):
        self.color_encoder_size = COLOR_ENCODER_SIZE
        self.e4e_size = E4E_SIZE
        self.mix_layer_range = MIX_LAYER_RANGE

        k1, k2, k3, k4 = jax.random.split(key, 4)
        d_color = 1 * COLOR_ENCODER_SIZE * COLOR_ENCODER_SIZE            # 1-ch input
        d_shape = 3 * E4E_SIZE * E4E_SIZE                                # repeated to 3-ch
        # color encoder: Encoder(1, encoder_size, 512) stand-in -> (B, 512)
        self.w_color = (jax.random.normal(k1, (d_color, LATENT_DIM), jnp.float32)
                        / np.sqrt(d_color))
        self.b_color = jax.random.normal(k2, (1, LATENT_DIM), jnp.float32) * 0.01
        # e4e encoder stand-in -> (B, L*512)
        self.w_shape = (jax.random.normal(k3, (d_shape, N_STYLE_LAYERS * LATENT_DIM),
                                          jnp.float32) / np.sqrt(d_shape))
        self.b_shape = (jax.random.normal(k4, (1, N_STYLE_LAYERS * LATENT_DIM),
                                          jnp.float32) * 0.01)

        # cache of folded weights keyed by input (H, W, C)
        self._folded = {}

    # ------------------------------------------------------------------
    # Fold resize -> normalize -> channel repeat -> encoders -> style mix
    # into one (H*W, L*512) weight + (1, L*512) bias, on the host (f32).
    # ------------------------------------------------------------------
    def _build_folded_np(self, H: int, W: int, C: int):
        assert C == 1, "color encoder stand-in (Encoder(1, ...)) expects 1-channel input"
        Se, Sc = self.e4e_size, self.color_encoder_size
        A_e = np.kron(bilinear_matrix(H, Se), bilinear_matrix(W, Se))   # (Se*Se, H*W)
        A_c = np.kron(bilinear_matrix(H, Sc), bilinear_matrix(W, Sc))   # (Sc*Sc, H*W)

        w_shape = np.asarray(self.w_shape)      # (3*Se*Se, L*512)
        b_shape = np.asarray(self.b_shape)      # (1, L*512)
        w_color = np.asarray(self.w_color)      # (Sc*Sc, 512)
        b_color = np.asarray(self.b_color)      # (1, 512)

        n = Se * Se
        # fold the 1->3 channel repeat: [r, r, r] @ w_shape == r @ (sum of channel blocks)
        w_sum = w_shape[:n] + w_shape[n:2 * n] + w_shape[2 * n:3 * n]   # (Se*Se, L*512)
        # fold (x - 0.5) / 0.5 == 2x - 1 and the shape-path resize
        w_shape_eff = A_e.T @ (2.0 * w_sum)                             # (H*W, L*512)
        b_shape_eff = b_shape - w_sum.sum(axis=0, keepdims=True)        # (1, L*512)
        # fold the color-path resize
        w_color_eff = A_c.T @ w_color                                   # (H*W, 512)
        b_color_eff = b_color                                           # (1, 512)

        # fold the style mix (latent[:, start:end] = color_code) into output columns
        s, e = self.mix_layer_range
        w_final = w_shape_eff.reshape(H * W, N_STYLE_LAYERS, LATENT_DIM).copy()
        b_final = b_shape_eff.reshape(1, N_STYLE_LAYERS, LATENT_DIM).copy()
        w_final[:, s:e, :] = w_color_eff[:, None, :]
        b_final[:, s:e, :] = b_color_eff[:, None, :]

        return (w_final.reshape(H * W, N_STYLE_LAYERS * LATENT_DIM).astype(np.float32),
                b_final.reshape(1, N_STYLE_LAYERS * LATENT_DIM).astype(np.float32))

    def _build_folded(self, H: int, W: int, C: int):
        w_f32, b_f32 = self._build_folded_np(H, W, C)
        # bf16 weight (halves the dominant HBM stream; MXU default precision already
        # rounds f32 operands to bf16).  Bias stays f32 for the f32 epilogue.
        w_final = jnp.asarray(w_f32, dtype=jnp.bfloat16)
        b_final = jnp.asarray(b_f32, dtype=jnp.float32)
        return w_final, b_final

    def forward(self, imgs_nchw: jnp.ndarray) -> jnp.ndarray:
        B, C, H, W = imgs_nchw.shape
        cache_key = (int(H), int(W), int(C))
        if cache_key not in self._folded:
            self._folded[cache_key] = self._build_folded(H, W, C)
        w_final, b_final = self._folded[cache_key]
        return _jitted_forward(imgs_nchw, w_final, b_final)   # (B, L, 512)


# ----------------------------------------------------------------------------
# Pure-numpy reference of the *unfused* forward (resize -> normalize -> repeat ->
# encoders -> mix), used to validate the algebraic folding and the device result.
# ----------------------------------------------------------------------------
def reference_forward_np(init: Initializer, imgs_np: np.ndarray) -> np.ndarray:
    B, C, H, W = imgs_np.shape
    Sc, Se = init.color_encoder_size, init.e4e_size
    A_hc, A_wc = bilinear_matrix(H, Sc), bilinear_matrix(W, Sc)
    A_he, A_we = bilinear_matrix(H, Se), bilinear_matrix(W, Se)

    # color path
    rc = np.einsum('sh,bchw,tw->bcst', A_hc, imgs_np, A_wc)
    color = rc.reshape(B, -1) @ np.asarray(init.w_color) + np.asarray(init.b_color)

    # shape path
    rs = np.einsum('sh,bchw,tw->bcst', A_he, imgs_np, A_we)
    rs = (rs - 0.5) / 0.5
    if rs.shape[1] == 1:
        rs = np.tile(rs, (1, 3, 1, 1))
    wplus = rs.reshape(B, -1) @ np.asarray(init.w_shape) + np.asarray(init.b_shape)
    shape_code = wplus.reshape(B, N_STYLE_LAYERS, LATENT_DIM)

    latent = shape_code.copy()
    s, e = init.mix_layer_range
    latent[:, s:e] = color[:, None, :]
    return latent


if __name__ == "__main__":
    key = jax.random.PRNGKey(0)
    k_img, k_params = jax.random.split(key)
    # grayscale images in [0, 1], NCHW like the PyTorch reference
    imgs = jax.random.uniform(k_img, (2, 1, 16, 16), dtype=jnp.float32)

    init = Initializer(k_params)
    latent = jax.block_until_ready(init.forward(imgs))

    assert latent.shape == (2, N_STYLE_LAYERS, LATENT_DIM)
    assert latent.dtype == jnp.float32

    imgs_np = np.asarray(imgs, dtype=np.float32)
    ref = reference_forward_np(init, imgs_np)

    # (1) tight host-side check that the f32 folded weight reproduces the unfused forward
    w_f32, b_f32 = init._build_folded_np(16, 16, 1)
    folded_host = (imgs_np.reshape(2, -1) @ w_f32 + b_f32).reshape(2, N_STYLE_LAYERS,
                                                                   LATENT_DIM)
    np.testing.assert_allclose(folded_host, ref, rtol=1e-4, atol=1e-4)

    # (2) device result vs reference (looser: bf16 weight / bf16 MXU operands,
    #     f32 accumulation — same precision class as the default MXU demotion)
    np.testing.assert_allclose(np.asarray(latent), ref, rtol=2e-2, atol=2e-2)

    # (3) mixed layers are exact copies of the (folded) color code across the range
    #     (K reduction order is identical for all duplicated output columns, even
    #      across different N tiles, so this stays bit-exact)
    s, e = MIX_LAYER_RANGE
    for l in range(s + 1, e):
        np.testing.assert_array_equal(np.asarray(latent[:, s]), np.asarray(latent[:, l]))

    print("KERNEL_OK")
</pallas_src>

<mosaic_0001>
module attributes {stable_mosaic.version = 11 : i64} {
  func.func @_fused_forward_kernel(%arg0: i32, %arg1: memref<8x256xf32, #tpu.memory_space<vmem>>, %arg2: memref<256x1024xbf16, #tpu.memory_space<vmem>>, %arg3: memref<1x1024xf32, #tpu.memory_space<vmem>>, %arg4: memref<8x1024xf32, #tpu.memory_space<vmem>>) attributes {dimension_semantics = [#tpu.dimension_semantics<parallel>], iteration_bounds = array<i64: 4>, scalar_prefetch = 0 : i64, scratch_operands = 0 : i64, tpu.core_type = #tpu.core_type<tc>, window_params = [{pipeline_mode = #tpu.pipeline_mode<synchronous>, transform_indices = @transform_0, window_bounds = array<i64: 8, 256>}, {transform_indices = @transform_1, window_bounds = array<i64: 256, 1024>}, {transform_indices = @transform_2, window_bounds = array<i64: 1, 1024>}, {transform_indices = @transform_3, window_bounds = array<i64: 8, 1024>}]} {
    %c0 = arith.constant 0 : index
    %c0_0 = arith.constant 0 : index
    %0 = vector.load %arg1[%c0, %c0_0] : memref<8x256xf32, #tpu.memory_space<vmem>>, vector<8x256xf32>
    %1 = arith.truncf %0 : vector<8x256xf32> to vector<8x256xbf16>
    %c0_1 = arith.constant 0 : index
    %c0_2 = arith.constant 0 : index
    %2 = vector.load %arg2[%c0_1, %c0_2] : memref<256x1024xbf16, #tpu.memory_space<vmem>>, vector<256x1024xbf16>
    %cst = arith.constant dense<0.000000e+00> : vector<8x1024xf32>
    %3 = tpu.matmul %1, %2, %cst {dimension_numbers = #tpu.dot_dimension_numbers<[1], [0], [0], [1], [0, 0, 1, 1], [], []>} : vector<8x256xbf16>, vector<256x1024xbf16>, vector<8x1024xf32> -> vector<8x1024xf32>
    %c0_3 = arith.constant 0 : index
    %c0_4 = arith.constant 0 : index
    %4 = vector.load %arg3[%c0_3, %c0_4] : memref<1x1024xf32, #tpu.memory_space<vmem>>, vector<1x1024xf32>
    %5 = vector.broadcast %4 : vector<1x1024xf32> to vector<8x1024xf32>
    %6 = arith.addf %3, %5 : vector<8x1024xf32>
    %c0_5 = arith.constant 0 : index
    %c0_6 = arith.constant 0 : index
    %7 = vector.load %arg4[%c0_5, %c0_6] : memref<8x1024xf32, #tpu.memory_space<vmem>>, vector<8x1024xf32>
    tpu.vector_store %arg4[%c0_5, %c0_6], %6 {strides = array<i32>} : memref<8x1024xf32, #tpu.memory_space<vmem>>, vector<8x1024xf32>,
    return
  }
  func.func @transform_0(%arg0: i32) -> (i32, i32) {
    %c0_i32 = arith.constant 0 : i32
    %c0_i32_0 = arith.constant 0 : i32
    %c0_i32_1 = arith.constant 0 : i32
    return %c0_i32, %c0_i32_0 : i32, i32
  }
  func.func @transform_1(%arg0: i32) -> (i32, i32) {
    %c0_i32 = arith.constant 0 : i32
    %c0_i32_0 = arith.constant 0 : i32
    return %c0_i32, %arg0 : i32, i32
  }
  func.func @transform_2(%arg0: i32) -> (i32, i32) {
    %c0_i32 = arith.constant 0 : i32
    %c0_i32_0 = arith.constant 0 : i32
    return %c0_i32, %arg0 : i32, i32
  }
  func.func @transform_3(%arg0: i32) -> (i32, i32) {
    %c0_i32 = arith.constant 0 : i32
    %c0_i32_0 = arith.constant 0 : i32
    return %c0_i32, %arg0 : i32, i32
  }
}

</mosaic_0001>

<llo_original>
// kernel: _jitted_forward.1
$region0: #{_jitted_forward.1}
  #allocation0 [shape = 'u32[]', space=smem, size = 0x4, offset = 0x4, fixed_abs, tag = 'smem constant byte address 0x4 - core index']
  #allocation1 [shape = 'u32[144,128]{1,0:T(1,128)}', space=vmem, size = 0x12000, scoped, tag = 'internal scratch']
  %s0 = inlined_call_operand.vmem [shape: f32[8,256], index: 0, kind: input, shape index: {}]
  %s1 = inlined_call_operand.hbm [shape: bf16[256,4096], index: 1, kind: input, shape index: {}]
  %s2 = inlined_call_operand.hbm [shape: f32[1,4096], index: 2, kind: input, shape index: {}]
  %s3 = inlined_call_operand.vmem [shape: f32[8,4096], index: 3, kind: output, shape index: {}]
  %s4 = sld [smem:[#allocation0]]
  $region53: #{_jitted_forward.1} parent=0
    _
  %s6 = ssub.s32 1, %s4
  %s7 = scalar_select 0, %s6, %s4
  $region1: #{_jitted_forward.1} parent=0
    #allocation2 [shape = 'u8[1048576]{0}', space=vmem, size = 0x100000, scoped, tag = 'input window, operand 1']
    #allocation3 [shape = 's32[2]{0}', space=sflag, size = 0x8, scoped, tag = 'scoped memory for _jitted_forward.1']
    #allocation4 [shape = 'u8[8192]{0}', space=vmem, size = 0x2000, scoped, tag = 'input window, operand 2']
    #allocation5 [shape = 's32[2]{0}', space=sflag, size = 0x8, scoped, tag = 'scoped memory for _jitted_forward.1']
    %8 = vsyncpa [#allocation3], 0
    %s9 = scalar_lea.sflag [#allocation3], 1
    %10 = vsyncpa %s9, 0
    %11 = vsyncpa [#allocation5], 0
    %s12 = scalar_lea.sflag [#allocation5], 1
    %13 = vsyncpa %s12, 0
    loop: start=0, step=1, limit=6
    $region2: #{_jitted_forward.1} parent=1 // loop_pre_header
      _
    $region3: #{_jitted_forward.1} parent=1 // loop_header
      %s15 = sphi 0, %s19
      %p16 = scmp.ge.s32.totalorder %s15, 6
      %s23 = sphi 0, %s23
      %s25 = sphi 0, %s23
      %s26 = sphi 0, %s25
      %s40 = sphi 0, %s26
      %s46 = sphi 0, %s48
      %s49 = sphi 0, %s46
      %s50 = sphi 0, %s49
      %s66 = sphi 0, %s50
      %s72 = sphi 0, %s74
      %s75 = sphi 0, %s72
      %s76 = sphi 0, %s75
      %s92 = sphi 0, %s76
      %s98 = sphi 0, %s100
      %s101 = sphi 0, %s98
      %s102 = sphi 0, %s101
      %s118 = sphi 0, %s102
    $region4: #{_jitted_forward.1} parent=1 // loop_header_branch
      %18 = sbr.rel (%p16) target = $region8
    $region5: #{_jitted_forward.1} parent=1 // loop_body
      %s20 = ssub.s32 %s15, 1
      %s21 = ssub.s32 %s15, 2
      %s22 = sadd.s32 %s15, 1
      %s24 = sadd.s32 %s23, 1
      %p27 = scmp.eq.s32.totalorder %s15, 3
      %p28 = scmp.ne.s32.totalorder %s23, %s25
      %p29 = scmp.eq.s32.totalorder %s15, 0
      %p30 = por %p28, %p29
      %p31 = scmp.ne.s32.totalorder %s23, %s25
      %p32 = scmp.eq.s32.totalorder %s20, 3
      %p33 = por %p31, %p32
      %p34 = scmp.ne.s32.totalorder %s25, %s26
      %p35 = scmp.eq.s32.totalorder %s20, 0
      %p36 = por %p34, %p35
      %p37 = scmp.ne.s32.totalorder %s25, %s26
      %p38 = scmp.eq.s32.totalorder %s21, 3
      %p39 = por %p37, %p38
      %p41 = scmp.ne.s32.totalorder %s26, %s40
      %p42 = scmp.eq.s32.totalorder %s21, 0
      %p43 = por %p41, %p42
      %s44 = ssub.s32 %s15, %s22
      %p45 = scmp.eq.s32.totalorder %s44, 0
      %s47 = sadd.s32 %s46, 1
      %s48 = scalar_select %p45, %s46, %s47
      %p51 = pneg %p45
      %p52 = scmp.eq.s32.totalorder %s15, 3
      %p53 = por %p51, %p52
      %p54 = scmp.ne.s32.totalorder %s46, %s49
      %p55 = scmp.eq.s32.totalorder %s15, 0
      %p56 = por %p54, %p55
      %p57 = scmp.ne.s32.totalorder %s46, %s49
      %p58 = scmp.eq.s32.totalorder %s20, 3
      %p59 = por %p57, %p58
      %p60 = scmp.ne.s32.totalorder %s49, %s50
      %p61 = scmp.eq.s32.totalorder %s20, 0
      %p62 = por %p60, %p61
      %p63 = scmp.ne.s32.totalorder %s49, %s50
      %p64 = scmp.eq.s32.totalorder %s21, 3
      %p65 = por %p63, %p64
      %p67 = scmp.ne.s32.totalorder %s50, %s66
      %p68 = scmp.eq.s32.totalorder %s21, 0
      %p69 = por %p67, %p68
      %s70 = ssub.s32 %s15, %s22
      %p71 = scmp.eq.s32.totalorder %s70, 0
      %s73 = sadd.s32 %s72, 1
      %s74 = scalar_select %p71, %s72, %s73
      %p77 = pneg %p71
      %p78 = scmp.eq.s32.totalorder %s15, 3
      %p79 = por %p77, %p78
      %p80 = scmp.ne.s32.totalorder %s72, %s75
      %p81 = scmp.eq.s32.totalorder %s15, 0
      %p82 = por %p80, %p81
      %p83 = scmp.ne.s32.totalorder %s72, %s75
      %p84 = scmp.eq.s32.totalorder %s20, 3
      %p85 = por %p83, %p84
      %p86 = scmp.ne.s32.totalorder %s75, %s76
      %p87 = scmp.eq.s32.totalorder %s20, 0
      %p88 = por %p86, %p87
      %p89 = scmp.ne.s32.totalorder %s75, %s76
      %p90 = scmp.eq.s32.totalorder %s21, 3
      %p91 = por %p89, %p90
      %p93 = scmp.ne.s32.totalorder %s76, %s92
      %p94 = scmp.eq.s32.totalorder %s21, 0
      %p95 = por %p93, %p94
      %s96 = ssub.s32 %s15, %s22
      %p97 = scmp.eq.s32.totalorder %s96, 0
      %s99 = sadd.s32 %s98, 1
      %s100 = scalar_select %p97, %s98, %s99
      %p103 = pneg %p97
      %p104 = scmp.eq.s32.totalorder %s15, 3
      %p105 = por %p103, %p104
      %p106 = scmp.ne.s32.totalorder %s98, %s101
      %p107 = scmp.eq.s32.totalorder %s15, 0
      %p108 = por %p106, %p107
      %p109 = scmp.ne.s32.totalorder %s98, %s101
      %p110 = scmp.eq.s32.totalorder %s20, 3
      %p111 = por %p109, %p110
      %p112 = scmp.ne.s32.totalorder %s101, %s102
      %p113 = scmp.eq.s32.totalorder %s20, 0
      %p114 = por %p112, %p113
      %p115 = scmp.ne.s32.totalorder %s101, %s102
      %p116 = scmp.eq.s32.totalorder %s21, 3
      %p117 = por %p115, %p116
      %p119 = scmp.ne.s32.totalorder %s102, %s118
      %p120 = scmp.eq.s32.totalorder %s21, 0
      %p121 = por %p119, %p120
      %p122 = scmp.le.s32.totalorder 1, %s15
      %p123 = scmp.lt.s32.totalorder %s15, 5
      %p124 = pnand %p122, %p123
      %p125 = pneg %p124
      // Predicated region
      $region9: #{_jitted_forward.1} parent=5 // pred_check
        _
      $region10: #{_jitted_forward.1} parent=5 // pred_check_branch
        %127 = sbr.rel (%p124) target = $region12
      $region11: #{_jitted_forward.1} parent=5 // pred_region
        %s128 = ssub.s32 %s15, 1
        // Predicated region
        $region13: #{_jitted_forward.1} parent=11 // pred_check
          %p129 = pneg %p36
        $region14: #{_jitted_forward.1} parent=11 // pred_check_branch
          %131 = sbr.rel (%p129) target = $region16
        $region15: #{_jitted_forward.1} parent=11 // pred_region
          _
        $region16: #{_jitted_forward.1} parent=11 // pred_fallthru
          _
      $region12: #{_jitted_forward.1} parent=5 // pred_fallthru
        _
      %p132 = scmp.lt.s32.totalorder %s15, 4
      // Predicated region
      $region17: #{_jitted_forward.1} parent=5 // pred_check
        %p133 = pneg %p132
      $region18: #{_jitted_forward.1} parent=5 // pred_check_branch
        %135 = sbr.rel (%p133) target = $region20
      $region19: #{_jitted_forward.1} parent=5 // pred_region
        // Predicated region
        $region21: #{_jitted_forward.1} parent=19 // pred_check
          %p136 = pneg %p56
        $region22: #{_jitted_forward.1} parent=19 // pred_check_branch
          %138 = sbr.rel (%p136) target = $region24
        $region23: #{_jitted_forward.1} parent=19 // pred_region
          %s139 = sand.u32 %s46, 1
          %s140 = scalar_lea.sflag [#allocation3], %s139
          %s141 = sand.u32 %s46, 1
          %s142 = smul.addr %s141, 1024
          %s143 = scalar_lea.vmem [#allocation2], %s142
          %s144 = smul.u32 8, %s15
          %s146 = ssub.s32 16384, 16384
          %147 = vsyncadd %s140, %s146
          %s148 = smul.addr %s144, 64
          %s149 = scalar_lea.hbm %s1, %s148
          %s150 = sshll.u32 %s143, 4
          %s151 = int_to_ptr.vmem [resolvable:$true] %s150
          %156 = dma.hbm_to_vmem [thread:$0]  %s149, 16384, %s151, %s140, 2048, 512, 32
        $region24: #{_jitted_forward.1} parent=19 // pred_fallthru
          _
        // Predicated region
        $region25: #{_jitted_forward.1} parent=19 // pred_check
          %p157 = pneg %p82
        $region26: #{_jitted_forward.1} parent=19 // pred_check_branch
          %159 = sbr.rel (%p157) target = $region28
        $region27: #{_jitted_forward.1} parent=19 // pred_region
          %s160 = sand.u32 %s72, 1
          %s161 = scalar_lea.sflag [#allocation5], %s160
          %s162 = sand.u32 %s72, 1
          %s163 = smul.addr %s162, 8
          %s164 = scalar_lea.vmem [#allocation4], %s163
          %s165 = smul.u32 8, %s15
          %s167 = ssub.s32 128, 128
          %168 = vsyncadd %s161, %s167
          %s169 = smul.addr %s165, 16
          %s170 = scalar_lea.hbm %s2, %s169
          %s172 = sshll.u32 %s164, 4
          %s173 = int_to_ptr.vmem [resolvable:$true] %s172
          %175 = dma.hbm_to_vmem [thread:$0]  %s170, 128, %s173, %s161
        $region28: #{_jitted_forward.1} parent=19 // pred_fallthru
          _
      $region20: #{_jitted_forward.1} parent=5 // pred_fallthru
        _
      %p176 = scmp.le.s32.totalorder 1, %s15
      %p177 = scmp.lt.s32.totalorder %s15, 5
      %p178 = pnand %p176, %p177
      %p179 = pneg %p178
      // Predicated region
      $region29: #{_jitted_forward.1} parent=5 // pred_check
        _
      $region30: #{_jitted_forward.1} parent=5 // pred_check_branch
        %181 = sbr.rel (%p178) target = $region32
      $region31: #{_jitted_forward.1} parent=5 // pred_region
        %s182 = ssub.s32 %s15, 1
        %s183 = sand.u32 %s49, 1
        %s184 = scalar_lea.sflag [#allocation3], %s183
        %s185 = sand.u32 %s49, 1
        %s186 = smul.addr %s185, 1024
        %s187 = scalar_lea.vmem [#allocation2], %s186
        // Predicated region
        $region33: #{_jitted_forward.1} parent=31 // pred_check
          %p188 = pneg %p62
        $region34: #{_jitted_forward.1} parent=31 // pred_check_branch
          %190 = sbr.rel (%p188) target = $region36
        $region35: #{_jitted_forward.1} parent=31 // pred_region
          %191 = dma.done %s184, 16384
        $region36: #{_jitted_forward.1} parent=31 // pred_fallthru
          _
        %s192 = sand.u32 %s75, 1
        %s193 = scalar_lea.sflag [#allocation5], %s192
        %s194 = sand.u32 %s75, 1
        %s195 = smul.addr %s194, 8
        %s196 = scalar_lea.vmem [#allocation4], %s195
        // Predicated region
        $region37: #{_jitted_forward.1} parent=31 // pred_check
          %p197 = pneg %p88
        $region38: #{_jitted_forward.1} parent=31 // pred_check_branch
          %199 = sbr.rel (%p197) target = $region40
        $region39: #{_jitted_forward.1} parent=31 // pred_region
          %200 = dma.done %s193, 128
        $region40: #{_jitted_forward.1} parent=31 // pred_fallthru
          _
        %p201 = pneg %p36
        %p202 = pneg %p33
        %s203 = sand.u32 %s49, 1
        %s204 = scalar_lea.sflag [#allocation3], %s203
        %s205 = sand.u32 %s49, 1
        %s206 = smul.addr %s205, 1024
        %s207 = scalar_lea.vmem [#allocation2], %s206
        %p208 = pneg %p62
        %p209 = pneg %p59
        %s210 = sand.u32 %s75, 1
        %s211 = scalar_lea.sflag [#allocation5], %s210
        %s212 = sand.u32 %s75, 1
        %s213 = smul.addr %s212, 8
        %s214 = scalar_lea.vmem [#allocation4], %s213
        %p215 = pneg %p88
        %p216 = pneg %p85
        %p217 = pneg %p114
        %p218 = pneg %p111
        %s219 = smul.u32 8, %s20
        %p220 = scmp.lt.s32.totalorder %s219, 31
        %s221 = scalar_select %p220, %s219, 31
        %s222 = smul.addr %s221, 8
        %s223 = scalar_lea.vmem %s3, %s222
        %s224 = smul.u32 8, %s20
        %s225 = smul.u32 8, %s20
        %s226 = smul.u32 8, %s20
        %p227 = scmp.lt.s32.totalorder %s226, 31
        %s228 = scalar_select %p227, %s226, 31
        %s229 = smul.addr %s228, 8
        %s230 = scalar_lea.vmem %s3, %s229
        %s231 = smul.u32 8, %s20
        %v232 = vld [vmem:[%s0] sm:$0xff]
        %v233 = vld [vmem:[%s0 + $0x8] sm:$0xff]
        %v234 = vpack.c.bf16 %v232, %v232
        %v235 = vpack.c.bf16 %v233, %v233
        %v236 = vld [vmem:[%s187] sm:$0xff]
        %v237 = vld [vmem:[%s187 + $0x8] sm:$0xff]
        %v238 = vld [vmem:[%s187 + $0x10] sm:$0xff]
        %v239 = vld [vmem:[%s187 + $0x18] sm:$0xff]
        %v240 = vld [vmem:[%s187 + $0x20] sm:$0xff]
        %v241 = vld [vmem:[%s187 + $0x28] sm:$0xff]
        %v242 = vld [vmem:[%s187 + $0x30] sm:$0xff]
        %v243 = vld [vmem:[%s187 + $0x38] sm:$0xff]
        %v244 = vld [vmem:[%s187 + $0x40] sm:$0xff]
        %v245 = vld [vmem:[%s187 + $0x48] sm:$0xff]
        %v246 = vld [vmem:[%s187 + $0x50] sm:$0xff]
        %v247 = vld [vmem:[%s187 + $0x58] sm:$0xff]
        %v248 = vld [vmem:[%s187 + $0x60] sm:$0xff]
        %v249 = vld [vmem:[%s187 + $0x68] sm:$0xff]
        %v250 = vld [vmem:[%s187 + $0x70] sm:$0xff]
        %v251 = vld [vmem:[%s187 + $0x78] sm:$0xff]
        %v252 = vld [vmem:[%s187 + $0x80] sm:$0xff]
        %v253 = vld [vmem:[%s187 + $0x88] sm:$0xff]
        %v254 = vld [vmem:[%s187 + $0x90] sm:$0xff]
        %v255 = vld [vmem:[%s187 + $0x98] sm:$0xff]
        %v256 = vld [vmem:[%s187 + $0xa0] sm:$0xff]
        %v257 = vld [vmem:[%s187 + $0xa8] sm:$0xff]
        %v258 = vld [vmem:[%s187 + $0xb0] sm:$0xff]
        %v259 = vld [vmem:[%s187 + $0xb8] sm:$0xff]
        %v260 = vld [vmem:[%s187 + $0xc0] sm:$0xff]
        %v261 = vld [vmem:[%s187 + $0xc8] sm:$0xff]
        %v262 = vld [vmem:[%s187 + $0xd0] sm:$0xff]
        %v263 = vld [vmem:[%s187 + $0xd8] sm:$0xff]
        %v264 = vld [vmem:[%s187 + $0xe0] sm:$0xff]
        %v265 = vld [vmem:[%s187 + $0xe8] sm:$0xff]
        %v266 = vld [vmem:[%s187 + $0xf0] sm:$0xff]
        %v267 = vld [vmem:[%s187 + $0xf8] sm:$0xff]
        %v268 = vld [vmem:[%s187 + $0x100] sm:$0xff]
        %v269 = vld [vmem:[%s187 + $0x108] sm:$0xff]
        %v270 = vld [vmem:[%s187 + $0x110] sm:$0xff]
        %v271 = vld [vmem:[%s187 + $0x118] sm:$0xff]
        %v272 = vld [vmem:[%s187 + $0x120] sm:$0xff]
        %v273 = vld [vmem:[%s187 + $0x128] sm:$0xff]
        %v274 = vld [vmem:[%s187 + $0x130] sm:$0xff]
        %v275 = vld [vmem:[%s187 + $0x138] sm:$0xff]
        %v276 = vld [vmem:[%s187 + $0x140] sm:$0xff]
        %v277 = vld [vmem:[%s187 + $0x148] sm:$0xff]
        %v278 = vld [vmem:[%s187 + $0x150] sm:$0xff]
        %v279 = vld [vmem:[%s187 + $0x158] sm:$0xff]
        %v280 = vld [vmem:[%s187 + $0x160] sm:$0xff]
        %v281 = vld [vmem:[%s187 + $0x168] sm:$0xff]
        %v282 = vld [vmem:[%s187 + $0x170] sm:$0xff]
        %v283 = vld [vmem:[%s187 + $0x178] sm:$0xff]
        %v284 = vld [vmem:[%s187 + $0x180] sm:$0xff]
        %v285 = vld [vmem:[%s187 + $0x188] sm:$0xff]
        %v286 = vld [vmem:[%s187 + $0x190] sm:$0xff]
        %v287 = vld [vmem:[%s187 + $0x198] sm:$0xff]
        %v288 = vld [vmem:[%s187 + $0x1a0] sm:$0xff]
        %v289 = vld [vmem:[%s187 + $0x1a8] sm:$0xff]
        %v290 = vld [vmem:[%s187 + $0x1b0] sm:$0xff]
        %v291 = vld [vmem:[%s187 + $0x1b8] sm:$0xff]
        %v292 = vld [vmem:[%s187 + $0x1c0] sm:$0xff]
        %v293 = vld [vmem:[%s187 + $0x1c8] sm:$0xff]
        %v294 = vld [vmem:[%s187 + $0x1d0] sm:$0xff]
        %v295 = vld [vmem:[%s187 + $0x1d8] sm:$0xff]
        %v296 = vld [vmem:[%s187 + $0x1e0] sm:$0xff]
        %v297 = vld [vmem:[%s187 + $0x1e8] sm:$0xff]
        %v298 = vld [vmem:[%s187 + $0x1f0] sm:$0xff]
        %v299 = vld [vmem:[%s187 + $0x1f8] sm:$0xff]
        %v300 = vld [vmem:[%s187 + $0x200] sm:$0xff]
        %v301 = vld [vmem:[%s187 + $0x208] sm:$0xff]
        %v302 = vld [vmem:[%s187 + $0x210] sm:$0xff]
        %v303 = vld [vmem:[%s187 + $0x218] sm:$0xff]
        %v304 = vld [vmem:[%s187 + $0x220] sm:$0xff]
        %v305 = vld [vmem:[%s187 + $0x228] sm:$0xff]
        %v306 = vld [vmem:[%s187 + $0x230] sm:$0xff]
        %v307 = vld [vmem:[%s187 + $0x238] sm:$0xff]
        %v308 = vld [vmem:[%s187 + $0x240] sm:$0xff]
        %v309 = vld [vmem:[%s187 + $0x248] sm:$0xff]
        %v310 = vld [vmem:[%s187 + $0x250] sm:$0xff]
        %v311 = vld [vmem:[%s187 + $0x258] sm:$0xff]
        %v312 = vld [vmem:[%s187 + $0x260] sm:$0xff]
        %v313 = vld [vmem:[%s187 + $0x268] sm:$0xff]
        %v314 = vld [vmem:[%s187 + $0x270] sm:$0xff]
        %v315 = vld [vmem:[%s187 + $0x278] sm:$0xff]
        %v316 = vld [vmem:[%s187 + $0x280] sm:$0xff]
        %v317 = vld [vmem:[%s187 + $0x288] sm:$0xff]
        %v318 = vld [vmem:[%s187 + $0x290] sm:$0xff]
        %v319 = vld [vmem:[%s187 + $0x298] sm:$0xff]
        %v320 = vld [vmem:[%s187 + $0x2a0] sm:$0xff]
        %v321 = vld [vmem:[%s187 + $0x2a8] sm:$0xff]
        %v322 = vld [vmem:[%s187 + $0x2b0] sm:$0xff]
        %v323 = vld [vmem:[%s187 + $0x2b8] sm:$0xff]
        %v324 = vld [vmem:[%s187 + $0x2c0] sm:$0xff]
        %v325 = vld [vmem:[%s187 + $0x2c8] sm:$0xff]
        %v326 = vld [vmem:[%s187 + $0x2d0] sm:$0xff]
        %v327 = vld [vmem:[%s187 + $0x2d8] sm:$0xff]
        %v328 = vld [vmem:[%s187 + $0x2e0] sm:$0xff]
        %v329 = vld [vmem:[%s187 + $0x2e8] sm:$0xff]
        %v330 = vld [vmem:[%s187 + $0x2f0] sm:$0xff]
        %v331 = vld [vmem:[%s187 + $0x2f8] sm:$0xff]
        %v332 = vld [vmem:[%s187 + $0x300] sm:$0xff]
        %v333 = vld [vmem:[%s187 + $0x308] sm:$0xff]
        %v334 = vld [vmem:[%s187 + $0x310] sm:$0xff]
        %v335 = vld [vmem:[%s187 + $0x318] sm:$0xff]
        %v336 = vld [vmem:[%s187 + $0x320] sm:$0xff]
        %v337 = vld [vmem:[%s187 + $0x328] sm:$0xff]
        %v338 = vld [vmem:[%s187 + $0x330] sm:$0xff]
        %v339 = vld [vmem:[%s187 + $0x338] sm:$0xff]
        %v340 = vld [vmem:[%s187 + $0x340] sm:$0xff]
        %v341 = vld [vmem:[%s187 + $0x348] sm:$0xff]
        %v342 = vld [vmem:[%s187 + $0x350] sm:$0xff]
        %v343 = vld [vmem:[%s187 + $0x358] sm:$0xff]
        %v344 = vld [vmem:[%s187 + $0x360] sm:$0xff]
        %v345 = vld [vmem:[%s187 + $0x368] sm:$0xff]
        %v346 = vld [vmem:[%s187 + $0x370] sm:$0xff]
        %v347 = vld [vmem:[%s187 + $0x378] sm:$0xff]
        %v348 = vld [vmem:[%s187 + $0x380] sm:$0xff]
        %v349 = vld [vmem:[%s187 + $0x388] sm:$0xff]
        %v350 = vld [vmem:[%s187 + $0x390] sm:$0xff]
        %v351 = vld [vmem:[%s187 + $0x398] sm:$0xff]
        %v352 = vld [vmem:[%s187 + $0x3a0] sm:$0xff]
        %v353 = vld [vmem:[%s187 + $0x3a8] sm:$0xff]
        %v354 = vld [vmem:[%s187 + $0x3b0] sm:$0xff]
        %v355 = vld [vmem:[%s187 + $0x3b8] sm:$0xff]
        %v356 = vld [vmem:[%s187 + $0x3c0] sm:$0xff]
        %v357 = vld [vmem:[%s187 + $0x3c8] sm:$0xff]
        %v358 = vld [vmem:[%s187 + $0x3d0] sm:$0xff]
        %v359 = vld [vmem:[%s187 + $0x3d8] sm:$0xff]
        %v360 = vld [vmem:[%s187 + $0x3e0] sm:$0xff]
        %v361 = vld [vmem:[%s187 + $0x3e8] sm:$0xff]
        %v362 = vld [vmem:[%s187 + $0x3f0] sm:$0xff]
        %v363 = vld [vmem:[%s187 + $0x3f8] sm:$0xff]
        %v364 = vld [vmem:[%s196] sm:$0xff]
        %v366 = vlaneseq
        %v367 = vshrl.u32 %v366, 7
        %v368 = vsub.s32 0, %v367
        %v369 = vrot.slane %v364, %v368
        %v370 = vlaneseq
        %v371 = vshrl.u32 %v370, 7
        %v372 = vsub.s32 1, %v371
        %v373 = vrot.slane %v364, %v372
        %v374 = vlaneseq
        %v375 = vshrl.u32 %v374, 7
        %v376 = vsub.s32 2, %v375
        %v377 = vrot.slane %v364, %v376
        %v378 = vlaneseq
        %v379 = vshrl.u32 %v378, 7
        %v380 = vsub.s32 3, %v379
        %v381 = vrot.slane %v364, %v380
        %v382 = vlaneseq
        %v383 = vshrl.u32 %v382, 7
        %v384 = vsub.s32 4, %v383
        %v385 = vrot.slane %v364, %v384
        %v386 = vlaneseq
        %v387 = vshrl.u32 %v386, 7
        %v388 = vsub.s32 5, %v387
        %v389 = vrot.slane %v364, %v388
        %v390 = vlaneseq
        %v391 = vshrl.u32 %v390, 7
        %v392 = vsub.s32 6, %v391
        %v393 = vrot.slane %v364, %v392
        %v394 = vlaneseq
        %v395 = vshrl.u32 %v394, 7
        %v396 = vsub.s32 7, %v395
        %v397 = vrot.slane %v364, %v396
        %v534 = vunpack.c.l.b16 %v236
        %v535 = vunpack.c.h.b16 %v236
        %v536 = vunpack.c.l.b16 %v237
        %v537 = vunpack.c.h.b16 %v237
        %v538 = vunpack.c.l.b16 %v238
        %v539 = vunpack.c.h.b16 %v238
        %v540 = vunpack.c.l.b16 %v239
        %v541 = vunpack.c.h.b16 %v239
        %v542 = vunpack.c.l.b16 %v240
        %v543 = vunpack.c.h.b16 %v240
        %v544 = vunpack.c.l.b16 %v241
        %v545 = vunpack.c.h.b16 %v241
        %v546 = vunpack.c.l.b16 %v242
        %v547 = vunpack.c.h.b16 %v242
        %v548 = vunpack.c.l.b16 %v243
        %v549 = vunpack.c.h.b16 %v243
        %v550 = vunpack.c.l.b16 %v244
        %v551 = vunpack.c.h.b16 %v244
        %v552 = vunpack.c.l.b16 %v245
        %v553 = vunpack.c.h.b16 %v245
        %v554 = vunpack.c.l.b16 %v246
        %v555 = vunpack.c.h.b16 %v246
        %v556 = vunpack.c.l.b16 %v247
        %v557 = vunpack.c.h.b16 %v247
        %v558 = vunpack.c.l.b16 %v248
        %v559 = vunpack.c.h.b16 %v248
        %v560 = vunpack.c.l.b16 %v249
        %v561 = vunpack.c.h.b16 %v249
        %v562 = vunpack.c.l.b16 %v250
        %v563 = vunpack.c.h.b16 %v250
        %v564 = vunpack.c.l.b16 %v251
        %v565 = vunpack.c.h.b16 %v251
        %v566 = vunpack.c.l.b16 %v252
        %v567 = vunpack.c.h.b16 %v252
        %v568 = vunpack.c.l.b16 %v253
        %v569 = vunpack.c.h.b16 %v253
        %v570 = vunpack.c.l.b16 %v254
        %v571 = vunpack.c.h.b16 %v254
        %v572 = vunpack.c.l.b16 %v255
        %v573 = vunpack.c.h.b16 %v255
        %v574 = vunpack.c.l.b16 %v256
        %v575 = vunpack.c.h.b16 %v256
        %v576 = vunpack.c.l.b16 %v257
        %v577 = vunpack.c.h.b16 %v257
        %v578 = vunpack.c.l.b16 %v258
        %v579 = vunpack.c.h.b16 %v258
        %v580 = vunpack.c.l.b16 %v259
        %v581 = vunpack.c.h.b16 %v259
        %v582 = vunpack.c.l.b16 %v260
        %v583 = vunpack.c.h.b16 %v260
        %v584 = vunpack.c.l.b16 %v261
        %v585 = vunpack.c.h.b16 %v261
        %v586 = vunpack.c.l.b16 %v262
        %v587 = vunpack.c.h.b16 %v262
        %v588 = vunpack.c.l.b16 %v263
        %v589 = vunpack.c.h.b16 %v263
        %v590 = vunpack.c.l.b16 %v264
        %v591 = vunpack.c.h.b16 %v264
        %v592 = vunpack.c.l.b16 %v265
        %v593 = vunpack.c.h.b16 %v265
        %v594 = vunpack.c.l.b16 %v266
        %v595 = vunpack.c.h.b16 %v266
        %v596 = vunpack.c.l.b16 %v267
        %v597 = vunpack.c.h.b16 %v267
        %v598 = vunpack.c.l.b16 %v268
        %v599 = vunpack.c.h.b16 %v268
        %v600 = vunpack.c.l.b16 %v269
        %v601 = vunpack.c.h.b16 %v269
        %v602 = vunpack.c.l.b16 %v270
        %v603 = vunpack.c.h.b16 %v270
        %v604 = vunpack.c.l.b16 %v271
        %v605 = vunpack.c.h.b16 %v271
        %v606 = vunpack.c.l.b16 %v272
        %v607 = vunpack.c.h.b16 %v272
        %v608 = vunpack.c.l.b16 %v273
        %v609 = vunpack.c.h.b16 %v273
        %v610 = vunpack.c.l.b16 %v274
        %v611 = vunpack.c.h.b16 %v274
        %v612 = vunpack.c.l.b16 %v275
        %v613 = vunpack.c.h.b16 %v275
        %v614 = vunpack.c.l.b16 %v276
        %v615 = vunpack.c.h.b16 %v276
        %v616 = vunpack.c.l.b16 %v277
        %v617 = vunpack.c.h.b16 %v277
        %v618 = vunpack.c.l.b16 %v278
        %v619 = vunpack.c.h.b16 %v278
        %v620 = vunpack.c.l.b16 %v279
        %v621 = vunpack.c.h.b16 %v279
        %v622 = vunpack.c.l.b16 %v280
        %v623 = vunpack.c.h.b16 %v280
        %v624 = vunpack.c.l.b16 %v281
        %v625 = vunpack.c.h.b16 %v281
        %v626 = vunpack.c.l.b16 %v282
        %v627 = vunpack.c.h.b16 %v282
        %v628 = vunpack.c.l.b16 %v283
        %v629 = vunpack.c.h.b16 %v283
        %v630 = vunpack.c.l.b16 %v284
        %v631 = vunpack.c.h.b16 %v284
        %v632 = vunpack.c.l.b16 %v285
        %v633 = vunpack.c.h.b16 %v285
        %v634 = vunpack.c.l.b16 %v286
        %v635 = vunpack.c.h.b16 %v286
        %v636 = vunpack.c.l.b16 %v287
        %v637 = vunpack.c.h.b16 %v287
        %v638 = vunpack.c.l.b16 %v288
        %v639 = vunpack.c.h.b16 %v288
        %v640 = vunpack.c.l.b16 %v289
        %v641 = vunpack.c.h.b16 %v289
        %v642 = vunpack.c.l.b16 %v290
        %v643 = vunpack.c.h.b16 %v290
        %v644 = vunpack.c.l.b16 %v291
        %v645 = vunpack.c.h.b16 %v291
        %v646 = vunpack.c.l.b16 %v292
        %v647 = vunpack.c.h.b16 %v292
        %v648 = vunpack.c.l.b16 %v293
        %v649 = vunpack.c.h.b16 %v293
        %v650 = vunpack.c.l.b16 %v294
        %v651 = vunpack.c.h.b16 %v294
        %v652 = vunpack.c.l.b16 %v295
        %v653 = vunpack.c.h.b16 %v295
        %v654 = vunpack.c.l.b16 %v296
        %v655 = vunpack.c.h.b16 %v296
        %v656 = vunpack.c.l.b16 %v297
        %v657 = vunpack.c.h.b16 %v297
        %v658 = vunpack.c.l.b16 %v298
        %v659 = vunpack.c.h.b16 %v298
        %v660 = vunpack.c.l.b16 %v299
        %v661 = vunpack.c.h.b16 %v299
        %v662 = vunpack.c.l.b16 %v300
        %v663 = vunpack.c.h.b16 %v300
        %v664 = vunpack.c.l.b16 %v301
        %v665 = vunpack.c.h.b16 %v301
        %v666 = vunpack.c.l.b16 %v302
        %v667 = vunpack.c.h.b16 %v302
        %v668 = vunpack.c.l.b16 %v303
        %v669 = vunpack.c.h.b16 %v303
        %v670 = vunpack.c.l.b16 %v304
        %v671 = vunpack.c.h.b16 %v304
        %v672 = vunpack.c.l.b16 %v305
        %v673 = vunpack.c.h.b16 %v305
        %v674 = vunpack.c.l.b16 %v306
        %v675 = vunpack.c.h.b16 %v306
        %v676 = vunpack.c.l.b16 %v307
        %v677 = vunpack.c.h.b16 %v307
        %v678 = vunpack.c.l.b16 %v308
        %v679 = vunpack.c.h.b16 %v308
        %v680 = vunpack.c.l.b16 %v309
        %v681 = vunpack.c.h.b16 %v309
        %v682 = vunpack.c.l.b16 %v310
        %v683 = vunpack.c.h.b16 %v310
        %v684 = vunpack.c.l.b16 %v311
        %v685 = vunpack.c.h.b16 %v311
        %v686 = vunpack.c.l.b16 %v312
        %v687 = vunpack.c.h.b16 %v312
        %v688 = vunpack.c.l.b16 %v313
        %v689 = vunpack.c.h.b16 %v313
        %v690 = vunpack.c.l.b16 %v314
        %v691 = vunpack.c.h.b16 %v314
        %v692 = vunpack.c.l.b16 %v315
        %v693 = vunpack.c.h.b16 %v315
        %v694 = vunpack.c.l.b16 %v316
        %v695 = vunpack.c.h.b16 %v316
        %v696 = vunpack.c.l.b16 %v317
        %v697 = vunpack.c.h.b16 %v317
        %v698 = vunpack.c.l.b16 %v318
        %v699 = vunpack.c.h.b16 %v318
        %v700 = vunpack.c.l.b16 %v319
        %v701 = vunpack.c.h.b16 %v319
        %v702 = vunpack.c.l.b16 %v320
        %v703 = vunpack.c.h.b16 %v320
        %v704 = vunpack.c.l.b16 %v321
        %v705 = vunpack.c.h.b16 %v321
        %v706 = vunpack.c.l.b16 %v322
        %v707 = vunpack.c.h.b16 %v322
        %v708 = vunpack.c.l.b16 %v323
        %v709 = vunpack.c.h.b16 %v323
        %v710 = vunpack.c.l.b16 %v324
        %v711 = vunpack.c.h.b16 %v324
        %v712 = vunpack.c.l.b16 %v325
        %v713 = vunpack.c.h.b16 %v325
        %v714 = vunpack.c.l.b16 %v326
        %v715 = vunpack.c.h.b16 %v326
        %v716 = vunpack.c.l.b16 %v327
        %v717 = vunpack.c.h.b16 %v327
        %v718 = vunpack.c.l.b16 %v328
        %v719 = vunpack.c.h.b16 %v328
        %v720 = vunpack.c.l.b16 %v329
        %v721 = vunpack.c.h.b16 %v329
        %v722 = vunpack.c.l.b16 %v330
        %v723 = vunpack.c.h.b16 %v330
        %v724 = vunpack.c.l.b16 %v331
        %v725 = vunpack.c.h.b16 %v331
        %v726 = vunpack.c.l.b16 %v332
        %v727 = vunpack.c.h.b16 %v332
        %v728 = vunpack.c.l.b16 %v333
        %v729 = vunpack.c.h.b16 %v333
        %v730 = vunpack.c.l.b16 %v334
        %v731 = vunpack.c.h.b16 %v334
        %v732 = vunpack.c.l.b16 %v335
        %v733 = vunpack.c.h.b16 %v335
        %v734 = vunpack.c.l.b16 %v336
        %v735 = vunpack.c.h.b16 %v336
        %v736 = vunpack.c.l.b16 %v337
        %v737 = vunpack.c.h.b16 %v337
        %v738 = vunpack.c.l.b16 %v338
        %v739 = vunpack.c.h.b16 %v338
        %v740 = vunpack.c.l.b16 %v339
        %v741 = vunpack.c.h.b16 %v339
        %v742 = vunpack.c.l.b16 %v340
        %v743 = vunpack.c.h.b16 %v340
        %v744 = vunpack.c.l.b16 %v341
        %v745 = vunpack.c.h.b16 %v341
        %v746 = vunpack.c.l.b16 %v342
        %v747 = vunpack.c.h.b16 %v342
        %v748 = vunpack.c.l.b16 %v343
        %v749 = vunpack.c.h.b16 %v343
        %v750 = vunpack.c.l.b16 %v344
        %v751 = vunpack.c.h.b16 %v344
        %v752 = vunpack.c.l.b16 %v345
        %v753 = vunpack.c.h.b16 %v345
        %v754 = vunpack.c.l.b16 %v346
        %v755 = vunpack.c.h.b16 %v346
        %v756 = vunpack.c.l.b16 %v347
        %v757 = vunpack.c.h.b16 %v347
        %v758 = vunpack.c.l.b16 %v348
        %v759 = vunpack.c.h.b16 %v348
        %v760 = vunpack.c.l.b16 %v349
        %v761 = vunpack.c.h.b16 %v349
        %v762 = vunpack.c.l.b16 %v350
        %v763 = vunpack.c.h.b16 %v350
        %v764 = vunpack.c.l.b16 %v351
        %v765 = vunpack.c.h.b16 %v351
        %v766 = vunpack.c.l.b16 %v352
        %v767 = vunpack.c.h.b16 %v352
        %v768 = vunpack.c.l.b16 %v353
        %v769 = vunpack.c.h.b16 %v353
        %v770 = vunpack.c.l.b16 %v354
        %v771 = vunpack.c.h.b16 %v354
        %v772 = vunpack.c.l.b16 %v355
        %v773 = vunpack.c.h.b16 %v355
        %v774 = vunpack.c.l.b16 %v356
        %v775 = vunpack.c.h.b16 %v356
        %v776 = vunpack.c.l.b16 %v357
        %v777 = vunpack.c.h.b16 %v357
        %v778 = vunpack.c.l.b16 %v358
        %v779 = vunpack.c.h.b16 %v358
        %v780 = vunpack.c.l.b16 %v359
        %v781 = vunpack.c.h.b16 %v359
        %v782 = vunpack.c.l.b16 %v360
        %v783 = vunpack.c.h.b16 %v360
        %v784 = vunpack.c.l.b16 %v361
        %v785 = vunpack.c.h.b16 %v361
        %v786 = vunpack.c.l.b16 %v362
        %v787 = vunpack.c.h.b16 %v362
        %v788 = vunpack.c.l.b16 %v363
        %v789 = vunpack.c.h.b16 %v363
        %v790 = vpack.c.b16 %v542, %v534
        %v791 = vpack.c.b16 %v543, %v535
        %v792 = vpack.c.b16 %v544, %v536
        %v793 = vpack.c.b16 %v545, %v537
        %v794 = vpack.c.b16 %v546, %v538
        %v795 = vpack.c.b16 %v547, %v539
        %v796 = vpack.c.b16 %v548, %v540
        %v797 = vpack.c.b16 %v549, %v541
        %v798 = vpack.c.b16 %v558, %v550
        %v799 = vpack.c.b16 %v559, %v551
        %v800 = vpack.c.b16 %v560, %v552
        %v801 = vpack.c.b16 %v561, %v553
        %v802 = vpack.c.b16 %v562, %v554
        %v803 = vpack.c.b16 %v563, %v555
        %v804 = vpack.c.b16 %v564, %v556
        %v805 = vpack.c.b16 %v565, %v557
        %v806 = vpack.c.b16 %v574, %v566
        %v807 = vpack.c.b16 %v575, %v567
        %v808 = vpack.c.b16 %v576, %v568
        %v809 = vpack.c.b16 %v577, %v569
        %v810 = vpack.c.b16 %v578, %v570
        %v811 = vpack.c.b16 %v579, %v571
        %v812 = vpack.c.b16 %v580, %v572
        %v813 = vpack.c.b16 %v581, %v573
        %v814 = vpack.c.b16 %v590, %v582
        %v815 = vpack.c.b16 %v591, %v583
        %v816 = vpack.c.b16 %v592, %v584
        %v817 = vpack.c.b16 %v593, %v585
        %v818 = vpack.c.b16 %v594, %v586
        %v819 = vpack.c.b16 %v595, %v587
        %v820 = vpack.c.b16 %v596, %v588
        %v821 = vpack.c.b16 %v597, %v589
        %v822 = vpack.c.b16 %v606, %v598
        %v823 = vpack.c.b16 %v607, %v599
        %v824 = vpack.c.b16 %v608, %v600
        %v825 = vpack.c.b16 %v609, %v601
        %v826 = vpack.c.b16 %v610, %v602
        %v827 = vpack.c.b16 %v611, %v603
        %v828 = vpack.c.b16 %v612, %v604
        %v829 = vpack.c.b16 %v613, %v605
        %v830 = vpack.c.b16 %v622, %v614
        %v831 = vpack.c.b16 %v623, %v615
        %v832 = vpack.c.b16 %v624, %v616
        %v833 = vpack.c.b16 %v625, %v617
        %v834 = vpack.c.b16 %v626, %v618
        %v835 = vpack.c.b16 %v627, %v619
        %v836 = vpack.c.b16 %v628, %v620
        %v837 = vpack.c.b16 %v629, %v621
        %v838 = vpack.c.b16 %v638, %v630
        %v839 = vpack.c.b16 %v639, %v631
        %v840 = vpack.c.b16 %v640, %v632
        %v841 = vpack.c.b16 %v641, %v633
        %v842 = vpack.c.b16 %v642, %v634
        %v843 = vpack.c.b16 %v643, %v635
        %v844 = vpack.c.b16 %v644, %v636
        %v845 = vpack.c.b16 %v645, %v637
        %v846 = vpack.c.b16 %v654, %v646
        %v847 = vpack.c.b16 %v655, %v647
        %v848 = vpack.c.b16 %v656, %v648
        %v849 = vpack.c.b16 %v657, %v649
        %v850 = vpack.c.b16 %v658, %v650
        %v851 = vpack.c.b16 %v659, %v651
        %v852 = vpack.c.b16 %v660, %v652
        %v853 = vpack.c.b16 %v661, %v653
        %v854 = vpack.c.b16 %v670, %v662
        %v855 = vpack.c.b16 %v671, %v663
        %v856 = vpack.c.b16 %v672, %v664
        %v857 = vpack.c.b16 %v673, %v665
        %v858 = vpack.c.b16 %v674, %v666
        %v859 = vpack.c.b16 %v675, %v667
        %v860 = vpack.c.b16 %v676, %v668
        %v861 = vpack.c.b16 %v677, %v669
        %v862 = vpack.c.b16 %v686, %v678
        %v863 = vpack.c.b16 %v687, %v679
        %v864 = vpack.c.b16 %v688, %v680
        %v865 = vpack.c.b16 %v689, %v681
        %v866 = vpack.c.b16 %v690, %v682
        %v867 = vpack.c.b16 %v691, %v683
        %v868 = vpack.c.b16 %v692, %v684
        %v869 = vpack.c.b16 %v693, %v685
        %v870 = vpack.c.b16 %v702, %v694
        %v871 = vpack.c.b16 %v703, %v695
        %v872 = vpack.c.b16 %v704, %v696
        %v873 = vpack.c.b16 %v705, %v697
        %v874 = vpack.c.b16 %v706, %v698
        %v875 = vpack.c.b16 %v707, %v699
        %v876 = vpack.c.b16 %v708, %v700
        %v877 = vpack.c.b16 %v709, %v701
        %v878 = vpack.c.b16 %v718, %v710
        %v879 = vpack.c.b16 %v719, %v711
        %v880 = vpack.c.b16 %v720, %v712
        %v881 = vpack.c.b16 %v721, %v713
        %v882 = vpack.c.b16 %v722, %v714
        %v883 = vpack.c.b16 %v723, %v715
        %v884 = vpack.c.b16 %v724, %v716
        %v885 = vpack.c.b16 %v725, %v717
        %v886 = vpack.c.b16 %v734, %v726
        %v887 = vpack.c.b16 %v735, %v727
        %v888 = vpack.c.b16 %v736, %v728
        %v889 = vpack.c.b16 %v737, %v729
        %v890 = vpack.c.b16 %v738, %v730
        %v891 = vpack.c.b16 %v739, %v731
        %v892 = vpack.c.b16 %v740, %v732
        %v893 = vpack.c.b16 %v741, %v733
        %v894 = vpack.c.b16 %v750, %v742
        %v895 = vpack.c.b16 %v751, %v743
        %v896 = vpack.c.b16 %v752, %v744
        %v897 = vpack.c.b16 %v753, %v745
        %v898 = vpack.c.b16 %v754, %v746
        %v899 = vpack.c.b16 %v755, %v747
        %v900 = vpack.c.b16 %v756, %v748
        %v901 = vpack.c.b16 %v757, %v749
        %v902 = vpack.c.b16 %v766, %v758
        %v903 = vpack.c.b16 %v767, %v759
        %v904 = vpack.c.b16 %v768, %v760
        %v905 = vpack.c.b16 %v769, %v761
        %v906 = vpack.c.b16 %v770, %v762
        %v907 = vpack.c.b16 %v771, %v763
        %v908 = vpack.c.b16 %v772, %v764
        %v909 = vpack.c.b16 %v773, %v765
        %v910 = vpack.c.b16 %v782, %v774
        %v911 = vpack.c.b16 %v783, %v775
        %v912 = vpack.c.b16 %v784, %v776
        %v913 = vpack.c.b16 %v785, %v777
        %v914 = vpack.c.b16 %v786, %v778
        %v915 = vpack.c.b16 %v787, %v779
        %v916 = vpack.c.b16 %v788, %v780
        %v917 = vpack.c.b16 %v789, %v781
        %1046 = vmatprep.subr.bf16.mxu0 %v847
        %1047 = vmatpush1.bf16.msra.mxu0 %v846
        %1048 = vmatprep.subr.bf16.mxu0 %v839
        %1049 = vmatpush1.bf16.msra.mxu0 %v838
        %1050 = vmatprep.subr.bf16.mxu0 %v831
        %1051 = vmatpush1.bf16.msra.mxu0 %v830
        %1052 = vmatprep.subr.bf16.mxu0 %v823
        %1053 = vmatpush1.bf16.msra.mxu0 %v822
        %1054 = vmatprep.subr.bf16.mxu0 %v815
        %1055 = vmatpush1.bf16.msra.mxu0 %v814
        %1056 = vmatprep.subr.bf16.mxu0 %v807
        %1057 = vmatpush1.bf16.msra.mxu0 %v806
        %1058 = vmatprep.subr.bf16.mxu0 %v799
        %1059 = vmatpush1.bf16.msra.mxu0 %v798
        %1060 = vmatprep.subr.bf16.mxu0 %v791
        %1061 = vmatpush1.bf16.msra.mxu0 %v790
        %1062 = vmatprep.subr.bf16.mxu0 %v911
        %1063 = vmatpush2.bf16.msra.mxu0 %v910
        %1064 = vmatprep.subr.bf16.mxu0 %v903
        %1065 = vmatpush2.bf16.msra.mxu0 %v902
        %1066 = vmatprep.subr.bf16.mxu0 %v895
        %1067 = vmatpush2.bf16.msra.mxu0 %v894
        %1068 = vmatprep.subr.bf16.mxu0 %v887
        %1069 = vmatpush2.bf16.msra.mxu0 %v886
        %1070 = vmatprep.subr.bf16.mxu0 %v879
        %1071 = vmatpush2.bf16.msra.mxu0 %v878
        %1072 = vmatprep.subr.bf16.mxu0 %v871
        %1073 = vmatpush2.bf16.msra.mxu0 %v870
        %1074 = vmatprep.subr.bf16.mxu0 %v863
        %1075 = vmatpush2.bf16.msra.mxu0 %v862
        %1076 = vmatprep.subr.bf16.mxu0 %v855
        %1077 = vmatpush2.bf16.msra.mxu0 %v854
        %1078 = vmatprep.mubr.bf16.mxu0 %v235
        %1079 = vmatmul.mubr.bf16.gmra.mxu0 %v234
        %v1080 = vpop.f32.mrf.mxu0
        %v1081 = vadd.f32 %v369, %v1080
        %v1082 = vpop.f32.mrf.mxu0
        %v1083 = vadd.f32 %v373, %v1082
        %v1084 = vpop.f32.mrf.mxu0
        %v1085 = vpop.f32.mrf.mxu0
        %1086 = vdwg.mxu0
        %1087 = vmatprep.subr.bf16.mxu0 %v849
        %1088 = vmatpush1.bf16.msra.mxu0 %v848
        %1089 = vmatprep.subr.bf16.mxu0 %v841
        %1090 = vmatpush1.bf16.msra.mxu0 %v840
        %1091 = vmatprep.subr.bf16.mxu0 %v833
        %1092 = vmatpush1.bf16.msra.mxu0 %v832
        %1093 = vmatprep.subr.bf16.mxu0 %v825
        %1094 = vmatpush1.bf16.msra.mxu0 %v824
        %1095 = vmatprep.subr.bf16.mxu0 %v817
        %1096 = vmatpush1.bf16.msra.mxu0 %v816
        %1097 = vmatprep.subr.bf16.mxu0 %v809
        %1098 = vmatpush1.bf16.msra.mxu0 %v808
        %1099 = vmatprep.subr.bf16.mxu0 %v801
        %1100 = vmatpush1.bf16.msra.mxu0 %v800
        %1101 = vmatprep.subr.bf16.mxu0 %v793
        %1102 = vmatpush1.bf16.msra.mxu0 %v792
        %1103 = vmatprep.subr.bf16.mxu0 %v913
        %1104 = vmatpush2.bf16.msra.mxu0 %v912
        %1105 = vmatprep.subr.bf16.mxu0 %v905
        %1106 = vmatpush2.bf16.msra.mxu0 %v904
        %1107 = vmatprep.subr.bf16.mxu0 %v897
        %1108 = vmatpush2.bf16.msra.mxu0 %v896
        %1109 = vmatprep.subr.bf16.mxu0 %v889
        %1110 = vmatpush2.bf16.msra.mxu0 %v888
        %1111 = vmatprep.subr.bf16.mxu0 %v881
        %1112 = vmatpush2.bf16.msra.mxu0 %v880
        %1113 = vmatprep.subr.bf16.mxu0 %v873
        %1114 = vmatpush2.bf16.msra.mxu0 %v872
        %1115 = vmatprep.subr.bf16.mxu0 %v865
        %1116 = vmatpush2.bf16.msra.mxu0 %v864
        %1117 = vmatprep.subr.bf16.mxu0 %v857
        %1118 = vmatpush2.bf16.msra.mxu0 %v856
        %1119 = vmatprep.mubr.bf16.mxu0 %v235
        %1120 = vmatmul.mubr.bf16.gmra.mxu0 %v234
        %v1121 = vpop.f32.mrf.mxu0
        %v1122 = vadd.f32 %v377, %v1121
        %v1123 = vpop.f32.mrf.mxu0
        %v1124 = vadd.f32 %v381, %v1123
        %v1125 = vpop.f32.mrf.mxu0
        %v1126 = vpop.f32.mrf.mxu0
        %1127 = vdwg.mxu0
        %1128 = vmatprep.subr.bf16.mxu0 %v851
        %1129 = vmatpush1.bf16.msra.mxu0 %v850
        %1130 = vmatprep.subr.bf16.mxu0 %v843
        %1131 = vmatpush1.bf16.msra.mxu0 %v842
        %1132 = vmatprep.subr.bf16.mxu0 %v835
        %1133 = vmatpush1.bf16.msra.mxu0 %v834
        %1134 = vmatprep.subr.bf16.mxu0 %v827
        %1135 = vmatpush1.bf16.msra.mxu0 %v826
        %1136 = vmatprep.subr.bf16.mxu0 %v819
        %1137 = vmatpush1.bf16.msra.mxu0 %v818
        %1138 = vmatprep.subr.bf16.mxu0 %v811
        %1139 = vmatpush1.bf16.msra.mxu0 %v810
        %1140 = vmatprep.subr.bf16.mxu0 %v803
        %1141 = vmatpush1.bf16.msra.mxu0 %v802
        %1142 = vmatprep.subr.bf16.mxu0 %v795
        %1143 = vmatpush1.bf16.msra.mxu0 %v794
        %1144 = vmatprep.subr.bf16.mxu0 %v915
        %1145 = vmatpush2.bf16.msra.mxu0 %v914
        %1146 = vmatprep.subr.bf16.mxu0 %v907
        %1147 = vmatpush2.bf16.msra.mxu0 %v906
        %1148 = vmatprep.subr.bf16.mxu0 %v899
        %1149 = vmatpush2.bf16.msra.mxu0 %v898
        %1150 = vmatprep.subr.bf16.mxu0 %v891
        %1151 = vmatpush2.bf16.msra.mxu0 %v890
        %1152 = vmatprep.subr.bf16.mxu0 %v883
        %1153 = vmatpush2.bf16.msra.mxu0 %v882
        %1154 = vmatprep.subr.bf16.mxu0 %v875
        %1155 = vmatpush2.bf16.msra.mxu0 %v874
        %1156 = vmatprep.subr.bf16.mxu0 %v867
        %1157 = vmatpush2.bf16.msra.mxu0 %v866
        %1158 = vmatprep.subr.bf16.mxu0 %v859
        %1159 = vmatpush2.bf16.msra.mxu0 %v858
        %1160 = vmatprep.mubr.bf16.mxu0 %v235
        %1161 = vmatmul.mubr.bf16.gmra.mxu0 %v234
        %v1162 = vpop.f32.mrf.mxu0
        %v1163 = vadd.f32 %v385, %v1162
        %v1164 = vpop.f32.mrf.mxu0
        %v1165 = vadd.f32 %v389, %v1164
        %v1166 = vpop.f32.mrf.mxu0
        %v1167 = vpop.f32.mrf.mxu0
        %1168 = vdwg.mxu0
        %1169 = vmatprep.subr.bf16.mxu0 %v853
        %1170 = vmatpush1.bf16.msra.mxu0 %v852
        %1171 = vmatprep.subr.bf16.mxu0 %v845
        %1172 = vmatpush1.bf16.msra.mxu0 %v844
        %1173 = vmatprep.subr.bf16.mxu0 %v837
        %1174 = vmatpush1.bf16.msra.mxu0 %v836
        %1175 = vmatprep.subr.bf16.mxu0 %v829
        %1176 = vmatpush1.bf16.msra.mxu0 %v828
        %1177 = vmatprep.subr.bf16.mxu0 %v821
        %1178 = vmatpush1.bf16.msra.mxu0 %v820
        %1179 = vmatprep.subr.bf16.mxu0 %v813
        %1180 = vmatpush1.bf16.msra.mxu0 %v812
        %1181 = vmatprep.subr.bf16.mxu0 %v805
        %1182 = vmatpush1.bf16.msra.mxu0 %v804
        %1183 = vmatprep.subr.bf16.mxu0 %v797
        %1184 = vmatpush1.bf16.msra.mxu0 %v796
        %1185 = vmatprep.subr.bf16.mxu0 %v917
        %1186 = vmatpush2.bf16.msra.mxu0 %v916
        %1187 = vmatprep.subr.bf16.mxu0 %v909
        %1188 = vmatpush2.bf16.msra.mxu0 %v908
        %1189 = vmatprep.subr.bf16.mxu0 %v901
        %1190 = vmatpush2.bf16.msra.mxu0 %v900
        %1191 = vmatprep.subr.bf16.mxu0 %v893
        %1192 = vmatpush2.bf16.msra.mxu0 %v892
        %1193 = vmatprep.subr.bf16.mxu0 %v885
        %1194 = vmatpush2.bf16.msra.mxu0 %v884
        %1195 = vmatprep.subr.bf16.mxu0 %v877
        %1196 = vmatpush2.bf16.msra.mxu0 %v876
        %1197 = vmatprep.subr.bf16.mxu0 %v869
        %1198 = vmatpush2.bf16.msra.mxu0 %v868
        %1199 = vmatprep.subr.bf16.mxu0 %v861
        %1200 = vmatpush2.bf16.msra.mxu0 %v860
        %1201 = vmatprep.mubr.bf16.mxu0 %v235
        %1202 = vmatmul.mubr.bf16.gmra.mxu0 %v234
        %v1203 = vpop.f32.mrf.mxu0
        %v1204 = vadd.f32 %v393, %v1203
        %v1205 = vpop.f32.mrf.mxu0
        %v1206 = vadd.f32 %v397, %v1205
        %v1207 = vpop.f32.mrf.mxu0
        %v1208 = vpop.f32.mrf.mxu0
        %1209 = vdwg.mxu0
        %1210 = vst [vmem:[%s230] sm:$0xff] %v1081
        %1211 = vst [vmem:[%s230 + $0x8] sm:$0xff] %v1083
        %1212 = vst [vmem:[%s230 + $0x10] sm:$0xff] %v1122
        %1213 = vst [vmem:[%s230 + $0x18] sm:$0xff] %v1124
        %1214 = vst [vmem:[%s230 + $0x20] sm:$0xff] %v1163
        %1215 = vst [vmem:[%s230 + $0x28] sm:$0xff] %v1165
        %1216 = vst [vmem:[%s230 + $0x30] sm:$0xff] %v1204
        %1217 = vst [vmem:[%s230 + $0x38] sm:$0xff] %v1206
        %s1218 = smul.u32 8, %s20
        %p1219 = scmp.lt.s32.totalorder %s1218, 31
        %s1220 = scalar_select %p1219, %s1218, 31
        %s1221 = smul.addr %s1220, 8
        %s1222 = scalar_lea.vmem %s3, %s1221
        // Predicated region
        $region41: #{_jitted_forward.1} parent=31 // pred_check
          %p1223 = pneg %p111
        $region42: #{_jitted_forward.1} parent=31 // pred_check_branch
          %1225 = sbr.rel (%p1223) target = $region44
        $region43: #{_jitted_forward.1} parent=31 // pred_region
          %s1226 = smul.u32 8, %s20
        $region44: #{_jitted_forward.1} parent=31 // pred_fallthru
          _
      $region32: #{_jitted_forward.1} parent=5 // pred_fallthru
        _
      %p1227 = scmp.le.s32.totalorder 2, %s15
      // Predicated region
      $region45: #{_jitted_forward.1} parent=5 // pred_check
        %p1228 = pneg %p1227
      $region46: #{_jitted_forward.1} parent=5 // pred_check_branch
        %1230 = sbr.rel (%p1228) target = $region48
      $region47: #{_jitted_forward.1} parent=5 // pred_region
        %s1231 = ssub.s32 %s15, 2
        // Predicated region
        $region49: #{_jitted_forward.1} parent=47 // pred_check
          %p1232 = pneg %p117
        $region50: #{_jitted_forward.1} parent=47 // pred_check_branch
          %1234 = sbr.rel (%p1232) target = $region52
        $region51: #{_jitted_forward.1} parent=47 // pred_region
          %s1235 = smul.u32 8, %s21
          %p1236 = scmp.lt.s32.totalorder %s1235, 31
          %s1237 = scalar_select %p1236, %s1235, 31
          %s1238 = smul.addr %s1237, 8
          %s1239 = scalar_lea.vmem %s3, %s1238
        $region52: #{_jitted_forward.1} parent=47 // pred_fallthru
          _
      $region48: #{_jitted_forward.1} parent=5 // pred_fallthru
        _
    $region6: #{_jitted_forward.1} parent=1 // loop_footer
      %s19 = sadd.s32 1, %s15
    $region7: #{_jitted_forward.1} parent=1 // loop_footer_branch
      %14 = sbr.rel target = $region3
    $region8: #{_jitted_forward.1} parent=1 // loop_exit
      _
    %1240 = vsyncpa [#allocation3], 1
    %s1241 = scalar_lea.sflag [#allocation3], 1
    %1242 = vsyncpa %s1241, 1
    %1243 = vsyncpa [#allocation5], 1
    %s1244 = scalar_lea.sflag [#allocation5], 1
    %1245 = vsyncpa %s1244, 1

</llo_original>
